<compile_context>
chip_gen: v6e
topology: v6e:2x2x1
jax: 0.10.0
libtpu: 0.0.40
codegen_flags: <defaults>
</compile_context>

<pallas_src>
import functools

import jax
import jax.numpy as jnp
from jax.experimental import pallas as pl
from jax.experimental.pallas import tpu as pltpu


def _round_up(x, m):
    return (x + m - 1) // m * m


def _vmem_capacity_bytes():
    """Physical VMEM per TensorCore for the current chip (conservative fallback)."""
    try:
        info = pltpu.get_tpu_info()
        cap = int(getattr(info, "vmem_capacity_bytes", 0) or 0)
        if cap > 0:
            return cap
    except Exception:
        pass
    return 64 << 20  # v7x is the smallest — safe default


def _vae_kernel(*refs, training, latent_size, latent_pad, matmul_dtype):
    if training:
        (x_ref,
         w_e1_ref, b_e1_ref, w_e2_ref, b_e2_ref,
         w_ml_ref, b_ml_ref,
         w_d1_ref, b_d1_ref, w_d2_ref, b_d2_ref,
         eps_ref,
         recon_ref, mean_ref, logvar_ref) = refs
    else:
        (x_ref,
         w_e1_ref, b_e1_ref, w_e2_ref, b_e2_ref,
         w_ml_ref, b_ml_ref,
         w_d1_ref, b_d1_ref, w_d2_ref, b_d2_ref,
         recon_ref, mean_ref, logvar_ref) = refs
        eps_ref = None

    f32 = jnp.float32
    mm = matmul_dtype

    # ---- encode: Linear -> ReLU -> Linear -> ReLU (bf16 MXU, f32 accumulation) ----
    h = jnp.dot(x_ref[...], w_e1_ref[...], preferred_element_type=f32) + b_e1_ref[...]
    h = jnp.maximum(h, 0.0)
    h = jnp.dot(h.astype(mm), w_e2_ref[...], preferred_element_type=f32) + b_e2_ref[...]
    h = jnp.maximum(h, 0.0)

    # ---- gaussian param projection: mean | log_var fused into one MXU push ----
    mulv = jnp.dot(h.astype(mm), w_ml_ref[...], preferred_element_type=f32) + b_ml_ref[...]
    mean = mulv[:, :latent_pad]       # tile-aligned slice
    log_var = mulv[:, latent_pad:]    # tile-aligned slice

    # ---- reparameterize ----
    if training:
        std = jnp.exp(log_var * 0.5)                   # EUP exp
        # eps padded lanes only ever multiply zero rows of w_d1 -> values don't matter.
        z = mean + eps_ref[...].astype(f32) * std
    else:
        z = mean

    # ---- decode: Linear -> ReLU -> Linear -> ReLU -> Sigmoid (matches reference) ----
    d = jnp.dot(z.astype(mm), w_d1_ref[...], preferred_element_type=f32) + b_d1_ref[...]
    d = jnp.maximum(d, 0.0)
    d = jnp.dot(d.astype(mm), w_d2_ref[...], preferred_element_type=f32) + b_d2_ref[...]
    d = jnp.maximum(d, 0.0)
    # sigmoid(d) == 0.5 * (tanh(d/2) + 1): exact, all-EUP, no VALU divide.
    recon = 0.5 * (jnp.tanh(0.5 * d) + 1.0)

    # ---- exact-shape outputs: no wrapper-side slicing round trips ----
    recon_ref[...] = recon.astype(recon_ref.dtype)
    mean_ref[...] = mean[:, :latent_size].astype(mean_ref.dtype)
    logvar_ref[...] = log_var[:, :latent_size].astype(logvar_ref.dtype)


def make_vae_forward(params, image_size, hidden_size, latent_size, *,
                     matmul_dtype=jnp.bfloat16, recon_dtype=jnp.bfloat16,
                     block_batch=512):
    """Prepares (transpose/pad/cast) weights ONCE and returns a fast forward(x, eps)."""
    # Only *internal* feature dims (hidden, latent) are padded to lane multiples; the
    # external widths (image_size, latent_size outputs) keep their exact logical sizes
    # via full-dim blocks, so x / recon / mean / log_var need no wrapper pad or slice.
    h_pad = _round_up(hidden_size, 128)
    l_pad = _round_up(latent_size, 128)

    def wt(name, in_f, out_f, in_pad, out_pad):
        w = jnp.asarray(params[name + "_w"], jnp.float32).T          # (in, out)
        w = jnp.pad(w, ((0, in_pad - in_f), (0, out_pad - out_f)))   # zero-pad -> exact math
        return w.astype(matmul_dtype)

    def bb(name, out_f, out_pad):
        b = jnp.asarray(params[name + "_b"], jnp.float32).reshape(1, -1)
        return jnp.pad(b, ((0, 0), (0, out_pad - out_f)))            # keep biases f32

    w_e1 = wt("encode_1", image_size, hidden_size, image_size, h_pad)   # in-dim unpadded
    b_e1 = bb("encode_1", hidden_size, h_pad)
    w_e2 = wt("encode_2", hidden_size, hidden_size, h_pad, h_pad)
    b_e2 = bb("encode_2", hidden_size, h_pad)
    # mean | log_var fused along the output (lane) axis.
    w_ml = jnp.concatenate(
        [wt("mean", hidden_size, latent_size, h_pad, l_pad),
         wt("log_var", hidden_size, latent_size, h_pad, l_pad)], axis=1)
    b_ml = jnp.concatenate(
        [bb("mean", latent_size, l_pad), bb("log_var", latent_size, l_pad)], axis=1)
    w_d1 = wt("decode_1", latent_size, hidden_size, l_pad, h_pad)
    b_d1 = bb("decode_1", hidden_size, h_pad)
    w_d2 = wt("decode_2", hidden_size, image_size, h_pad, image_size)   # out-dim unpadded
    b_d2 = bb("decode_2", image_size, image_size)

    weight_args = (w_e1, b_e1, w_e2, b_e2, w_ml, b_ml, w_d1, b_d1, w_d2, b_d2)
    # Constant index_map -> weights/biases fetched once, VMEM-resident across grid steps.
    weight_specs = [pl.BlockSpec(a.shape, lambda i: (0, 0)) for a in weight_args]
    weight_bytes = sum(int(a.size) * a.dtype.itemsize for a in weight_args)

    vmem_cap = _vmem_capacity_bytes()       # 64 MiB (v7x) / 128 MiB (v5e, v6e)
    vmem_cap_budget = vmem_cap * 7 // 8     # headroom for Mosaic internals

    def forward(x, eps=None, *, training=True):
        if training and eps is None:
            raise ValueError("training=True requires eps of shape (batch, latent_size)")

        batch = x.shape[0]

        # Balanced batch tiles: minimize last-tile padding; force >= 2 grid steps for
        # decent batches so both v7x TensorCores get work and DMA overlaps compute.
        n_tiles = max(1, pl.cdiv(batch, block_batch))
        if n_tiles == 1 and batch >= 128:
            n_tiles = 2
        tb = _round_up(pl.cdiv(batch, n_tiles), 8)
        if tb >= batch:
            tb = batch            # one full-batch block (block dim == array dim is legal)
        grid = (pl.cdiv(batch, tb),)

        # Inputs in matmul dtype (bf16): half the input DMA bytes; casts fuse with the
        # producer under jit. x is NOT padded. eps pad to l_pad is tiny (latent only) and
        # its pad values are irrelevant (they hit zero weight rows).
        x_in = x.astype(matmul_dtype)

        kernel_inputs = [x_in, *weight_args]
        in_specs = [pl.BlockSpec((tb, image_size), lambda i: (i, 0))] + list(weight_specs)
        if training:
            eps_in = eps.astype(matmul_dtype)
            if l_pad != latent_size:
                eps_in = jnp.pad(eps_in, ((0, 0), (0, l_pad - latent_size)))
            kernel_inputs.append(eps_in)
            in_specs.append(pl.BlockSpec((tb, l_pad), lambda i: (i, 0)))

        # Exact-shape outputs: recon in bf16 (biggest output -> half the writeback),
        # mean / log_var in f32 for the KL term.
        out_shape = (
            jax.ShapeDtypeStruct((batch, image_size), recon_dtype),
            jax.ShapeDtypeStruct((batch, latent_size), jnp.float32),
            jax.ShapeDtypeStruct((batch, latent_size), jnp.float32),
        )
        out_specs = (
            pl.BlockSpec((tb, image_size), lambda i: (i, 0)),
            pl.BlockSpec((tb, latent_size), lambda i: (i, 0)),
            pl.BlockSpec((tb, latent_size), lambda i: (i, 0)),
        )

        # VMEM budget from actual tile sizes; generation-aware cap; never clamp below the
        # computed requirement (weights budgeted double-buffered, see header comment).
        mm_b = jnp.dtype(matmul_dtype).itemsize
        io_bytes = (2 * tb * image_size * mm_b                              # x tile
                    + 2 * tb * image_size * jnp.dtype(recon_dtype).itemsize # recon tile
                    + 2 * 2 * tb * latent_size * 4                          # mean/log_var
                    + (2 * tb * l_pad * mm_b if training else 0))           # eps tile
        interm_bytes = 6 * tb * max(h_pad, 2 * l_pad, image_size) * 4
        need = 2 * weight_bytes + io_bytes + interm_bytes + (4 << 20)
        vmem_limit = min(max(need, 16 << 20), vmem_cap_budget)
        if need > vmem_cap_budget:
            # TODO(synk): for very large hidden sizes, split hidden onto an extra
            # "arbitrary" grid axis instead of keeping every weight VMEM-resident.
            vmem_limit = need
        vmem_limit = int(vmem_limit)

        recon, mean, log_var = pl.pallas_call(
            functools.partial(_vae_kernel, training=training,
                              latent_size=latent_size, latent_pad=l_pad,
                              matmul_dtype=matmul_dtype),
            out_shape=out_shape,
            grid=grid,
            in_specs=in_specs,
            out_specs=out_specs,
            compiler_params=pltpu.CompilerParams(
                dimension_semantics=("parallel",),   # megacore sharding on v7x
                vmem_limit_bytes=vmem_limit),
        )(*kernel_inputs)
        return recon, mean, log_var

    return forward


def init_vae_params(key, image_size, hidden_size, latent_size):
    """Deterministic PyTorch-style (uniform +/- 1/sqrt(fan_in)) init, (out, in) weights."""
    layer_dims = {
        "encode_1": (hidden_size, image_size),
        "encode_2": (hidden_size, hidden_size),
        "mean": (latent_size, hidden_size),
        "log_var": (latent_size, hidden_size),
        "decode_1": (hidden_size, latent_size),
        "decode_2": (image_size, hidden_size),
    }
    params = {}
    for name, (out_f, in_f) in layer_dims.items():
        key, kw, kb = jax.random.split(key, 3)
        bound = 1.0 / jnp.sqrt(float(in_f))
        params[name + "_w"] = jax.random.uniform(
            kw, (out_f, in_f), jnp.float32, -bound, bound)
        params[name + "_b"] = jax.random.uniform(
            kb, (out_f,), jnp.float32, -bound, bound)
    return params


def _vae_reference(x, params, eps, training):
    """Pure-JAX f32 reference matching the PyTorch module exactly."""
    def lin(name, v):
        return v @ params[name + "_w"].T + params[name + "_b"]
    h = jax.nn.relu(lin("encode_1", x))
    h = jax.nn.relu(lin("encode_2", h))
    mean = lin("mean", h)
    log_var = lin("log_var", h)
    z = mean + eps * jnp.exp(log_var * 0.5) if training else mean
    d = jax.nn.relu(lin("decode_1", z))
    d = jax.nn.relu(lin("decode_2", d))
    recon = jax.nn.sigmoid(d)
    return recon, mean, log_var


if __name__ == "__main__":
    # Small shapes consistent with the module's forward.
    batch, image_size, hidden_size, latent_size = 8, 64, 32, 16

    key = jax.random.PRNGKey(0)
    k_x, k_eps, k_params = jax.random.split(key, 3)

    x = jax.random.normal(k_x, (batch, image_size), jnp.float32)
    # torch.randn_like(std) in the reference -> generated deterministically here.
    eps = jax.random.normal(k_eps, (batch, latent_size), jnp.float32)
    params = init_vae_params(k_params, image_size, hidden_size, latent_size)

    # Weight transpose/pad/cast hoisted out of the per-call path.
    vae_forward = make_vae_forward(params, image_size, hidden_size, latent_size)

    # jit the call so the tiny eps pad and dtype casts fuse with surrounding ops.
    fwd_train = jax.jit(lambda xb, eb: vae_forward(xb, eb, training=True))
    fwd_eval = jax.jit(lambda xb: vae_forward(xb, training=False))

    recon, mean, log_var = fwd_train(x, eps)
    jax.block_until_ready((recon, mean, log_var))

    assert recon.shape == (batch, image_size) and recon.dtype == jnp.bfloat16
    assert mean.shape == (batch, latent_size)
    assert log_var.shape == (batch, latent_size)
    recon_f32 = recon.astype(jnp.float32)
    assert bool(jnp.all(jnp.isfinite(recon_f32)))
    assert bool(jnp.all((recon_f32 >= 0.0) & (recon_f32 <= 1.0)))   # sigmoid range

    # Numerical check vs pure-JAX f32 reference (loose tol: bf16 matmul operands/output).
    r_ref, m_ref, lv_ref = _vae_reference(x, params, eps, True)
    assert float(jnp.max(jnp.abs(recon_f32 - r_ref))) < 1e-1
    assert float(jnp.max(jnp.abs(mean - m_ref))) < 1e-1
    assert float(jnp.max(jnp.abs(log_var - lv_ref))) < 1e-1

    # Inference path: eps is not passed and not DMA'd at all.
    recon_i, mean_i, log_var_i = fwd_eval(x)
    jax.block_until_ready((recon_i, mean_i, log_var_i))
    assert recon_i.shape == (batch, image_size)
    r_ref_i, m_ref_i, _ = _vae_reference(x, params, eps, False)
    assert float(jnp.max(jnp.abs(recon_i.astype(jnp.float32) - r_ref_i))) < 1e-1
    assert float(jnp.max(jnp.abs(mean_i - m_ref_i))) < 1e-1

    print("KERNEL_OK")
</pallas_src>

<mosaic_0001>
module attributes {stable_mosaic.version = 11 : i64} {
  func.func @_vae_kernel(%arg0: i32, %arg1: memref<8x64xbf16, #tpu.memory_space<vmem>>, %arg2: memref<64x128xbf16, #tpu.memory_space<vmem>>, %arg3: memref<1x128xf32, #tpu.memory_space<vmem>>, %arg4: memref<128x128xbf16, #tpu.memory_space<vmem>>, %arg5: memref<1x128xf32, #tpu.memory_space<vmem>>, %arg6: memref<128x256xbf16, #tpu.memory_space<vmem>>, %arg7: memref<1x256xf32, #tpu.memory_space<vmem>>, %arg8: memref<128x128xbf16, #tpu.memory_space<vmem>>, %arg9: memref<1x128xf32, #tpu.memory_space<vmem>>, %arg10: memref<128x64xbf16, #tpu.memory_space<vmem>>, %arg11: memref<1x64xf32, #tpu.memory_space<vmem>>, %arg12: memref<8x128xbf16, #tpu.memory_space<vmem>>, %arg13: memref<8x64xbf16, #tpu.memory_space<vmem>>, %arg14: memref<8x16xf32, #tpu.memory_space<vmem>>, %arg15: memref<8x16xf32, #tpu.memory_space<vmem>>) attributes {dimension_semantics = [#tpu.dimension_semantics<parallel>], iteration_bounds = array<i64: 1>, scalar_prefetch = 0 : i64, scratch_operands = 0 : i64, tpu.core_type = #tpu.core_type<tc>, window_params = [{transform_indices = @transform_0, window_bounds = array<i64: 8, 64>}, {pipeline_mode = #tpu.pipeline_mode<synchronous>, transform_indices = @transform_1, window_bounds = array<i64: 64, 128>}, {pipeline_mode = #tpu.pipeline_mode<synchronous>, transform_indices = @transform_2, window_bounds = array<i64: 1, 128>}, {pipeline_mode = #tpu.pipeline_mode<synchronous>, transform_indices = @transform_3, window_bounds = array<i64: 128, 128>}, {pipeline_mode = #tpu.pipeline_mode<synchronous>, transform_indices = @transform_4, window_bounds = array<i64: 1, 128>}, {pipeline_mode = #tpu.pipeline_mode<synchronous>, transform_indices = @transform_5, window_bounds = array<i64: 128, 256>}, {pipeline_mode = #tpu.pipeline_mode<synchronous>, transform_indices = @transform_6, window_bounds = array<i64: 1, 256>}, {pipeline_mode = #tpu.pipeline_mode<synchronous>, transform_indices = @transform_7, window_bounds = array<i64: 128, 128>}, {pipeline_mode = #tpu.pipeline_mode<synchronous>, transform_indices = @transform_8, window_bounds = array<i64: 1, 128>}, {pipeline_mode = #tpu.pipeline_mode<synchronous>, transform_indices = @transform_9, window_bounds = array<i64: 128, 64>}, {pipeline_mode = #tpu.pipeline_mode<synchronous>, transform_indices = @transform_10, window_bounds = array<i64: 1, 64>}, {transform_indices = @transform_11, window_bounds = array<i64: 8, 128>}, {transform_indices = @transform_12, window_bounds = array<i64: 8, 64>}, {transform_indices = @transform_13, window_bounds = array<i64: 8, 16>}, {transform_indices = @transform_14, window_bounds = array<i64: 8, 16>}]} {
    %c0 = arith.constant 0 : index
    %c0_0 = arith.constant 0 : index
    %0 = vector.load %arg1[%c0, %c0_0] : memref<8x64xbf16, #tpu.memory_space<vmem>>, vector<8x64xbf16>
    %c0_1 = arith.constant 0 : index
    %c0_2 = arith.constant 0 : index
    %1 = vector.load %arg2[%c0_1, %c0_2] : memref<64x128xbf16, #tpu.memory_space<vmem>>, vector<64x128xbf16>
    %cst = arith.constant dense<0.000000e+00> : vector<8x128xf32>
    %2 = tpu.matmul %0, %1, %cst {dimension_numbers = #tpu.dot_dimension_numbers<[1], [0], [0], [1], [0, 0, 1, 1], [], []>} : vector<8x64xbf16>, vector<64x128xbf16>, vector<8x128xf32> -> vector<8x128xf32>
    %c0_3 = arith.constant 0 : index
    %c0_4 = arith.constant 0 : index
    %3 = vector.load %arg3[%c0_3, %c0_4] : memref<1x128xf32, #tpu.memory_space<vmem>>, vector<1x128xf32>
    %4 = vector.broadcast %3 : vector<1x128xf32> to vector<8x128xf32>
    %5 = arith.addf %2, %4 : vector<8x128xf32>
    %cst_5 = arith.constant 0.000000e+00 : f32
    %6 = vector.broadcast %cst_5 : f32 to vector<8x128xf32>
    %7 = arith.maximumf %5, %6 : vector<8x128xf32>
    %8 = arith.truncf %7 : vector<8x128xf32> to vector<8x128xbf16>
    %c0_6 = arith.constant 0 : index
    %c0_7 = arith.constant 0 : index
    %9 = vector.load %arg4[%c0_6, %c0_7] : memref<128x128xbf16, #tpu.memory_space<vmem>>, vector<128x128xbf16>
    %cst_8 = arith.constant dense<0.000000e+00> : vector<8x128xf32>
    %10 = tpu.matmul %8, %9, %cst_8 {dimension_numbers = #tpu.dot_dimension_numbers<[1], [0], [0], [1], [0, 0, 1, 1], [], []>} : vector<8x128xbf16>, vector<128x128xbf16>, vector<8x128xf32> -> vector<8x128xf32>
    %c0_9 = arith.constant 0 : index
    %c0_10 = arith.constant 0 : index
    %11 = vector.load %arg5[%c0_9, %c0_10] : memref<1x128xf32, #tpu.memory_space<vmem>>, vector<1x128xf32>
    %12 = vector.broadcast %11 : vector<1x128xf32> to vector<8x128xf32>
    %13 = arith.addf %10, %12 : vector<8x128xf32>
    %cst_11 = arith.constant 0.000000e+00 : f32
    %14 = vector.broadcast %cst_11 : f32 to vector<8x128xf32>
    %15 = arith.maximumf %13, %14 : vector<8x128xf32>
    %16 = arith.truncf %15 : vector<8x128xf32> to vector<8x128xbf16>
    %c0_12 = arith.constant 0 : index
    %c0_13 = arith.constant 0 : index
    %17 = vector.load %arg6[%c0_12, %c0_13] : memref<128x256xbf16, #tpu.memory_space<vmem>>, vector<128x256xbf16>
    %cst_14 = arith.constant dense<0.000000e+00> : vector<8x256xf32>
    %18 = tpu.matmul %16, %17, %cst_14 {dimension_numbers = #tpu.dot_dimension_numbers<[1], [0], [0], [1], [0, 0, 1, 1], [], []>} : vector<8x128xbf16>, vector<128x256xbf16>, vector<8x256xf32> -> vector<8x256xf32>
    %c0_15 = arith.constant 0 : index
    %c0_16 = arith.constant 0 : index
    %19 = vector.load %arg7[%c0_15, %c0_16] : memref<1x256xf32, #tpu.memory_space<vmem>>, vector<1x256xf32>
    %20 = vector.broadcast %19 : vector<1x256xf32> to vector<8x256xf32>
    %21 = arith.addf %18, %20 : vector<8x256xf32>
    %22 = vector.extract_strided_slice %21 {offsets = [0, 0], sizes = [8, 128], strides = [1, 1]} : vector<8x256xf32> to vector<8x128xf32>
    %23 = vector.extract_strided_slice %21 {offsets = [0, 128], sizes = [8, 128], strides = [1, 1]} : vector<8x256xf32> to vector<8x128xf32>
    %cst_17 = arith.constant 5.000000e-01 : f32
    %24 = vector.broadcast %cst_17 : f32 to vector<8x128xf32>
    %25 = arith.mulf %23, %24 : vector<8x128xf32>
    %26 = math.exp %25 : vector<8x128xf32>
    %c0_18 = arith.constant 0 : index
    %c0_19 = arith.constant 0 : index
    %27 = vector.load %arg12[%c0_18, %c0_19] : memref<8x128xbf16, #tpu.memory_space<vmem>>, vector<8x128xbf16>
    %28 = arith.extf %27 : vector<8x128xbf16> to vector<8x128xf32>
    %29 = arith.mulf %28, %26 : vector<8x128xf32>
    %30 = arith.addf %22, %29 : vector<8x128xf32>
    %31 = arith.truncf %30 : vector<8x128xf32> to vector<8x128xbf16>
    %c0_20 = arith.constant 0 : index
    %c0_21 = arith.constant 0 : index
    %32 = vector.load %arg8[%c0_20, %c0_21] : memref<128x128xbf16, #tpu.memory_space<vmem>>, vector<128x128xbf16>
    %cst_22 = arith.constant dense<0.000000e+00> : vector<8x128xf32>
    %33 = tpu.matmul %31, %32, %cst_22 {dimension_numbers = #tpu.dot_dimension_numbers<[1], [0], [0], [1], [0, 0, 1, 1], [], []>} : vector<8x128xbf16>, vector<128x128xbf16>, vector<8x128xf32> -> vector<8x128xf32>
    %c0_23 = arith.constant 0 : index
    %c0_24 = arith.constant 0 : index
    %34 = vector.load %arg9[%c0_23, %c0_24] : memref<1x128xf32, #tpu.memory_space<vmem>>, vector<1x128xf32>
    %35 = vector.broadcast %34 : vector<1x128xf32> to vector<8x128xf32>
    %36 = arith.addf %33, %35 : vector<8x128xf32>
    %cst_25 = arith.constant 0.000000e+00 : f32
    %37 = vector.broadcast %cst_25 : f32 to vector<8x128xf32>
    %38 = arith.maximumf %36, %37 : vector<8x128xf32>
    %39 = arith.truncf %38 : vector<8x128xf32> to vector<8x128xbf16>
    %c0_26 = arith.constant 0 : index
    %c0_27 = arith.constant 0 : index
    %40 = vector.load %arg10[%c0_26, %c0_27] : memref<128x64xbf16, #tpu.memory_space<vmem>>, vector<128x64xbf16>
    %cst_28 = arith.constant dense<0.000000e+00> : vector<8x64xf32>
    %41 = tpu.matmul %39, %40, %cst_28 {dimension_numbers = #tpu.dot_dimension_numbers<[1], [0], [0], [1], [0, 0, 1, 1], [], []>} : vector<8x128xbf16>, vector<128x64xbf16>, vector<8x64xf32> -> vector<8x64xf32>
    %c0_29 = arith.constant 0 : index
    %c0_30 = arith.constant 0 : index
    %42 = vector.load %arg11[%c0_29, %c0_30] : memref<1x64xf32, #tpu.memory_space<vmem>>, vector<1x64xf32>
    %43 = vector.broadcast %42 : vector<1x64xf32> to vector<8x64xf32>
    %44 = arith.addf %41, %43 : vector<8x64xf32>
    %cst_31 = arith.constant 0.000000e+00 : f32
    %45 = vector.broadcast %cst_31 : f32 to vector<8x64xf32>
    %46 = arith.maximumf %44, %45 : vector<8x64xf32>
    %cst_32 = arith.constant 5.000000e-01 : f32
    %47 = vector.broadcast %cst_32 : f32 to vector<8x64xf32>
    %48 = arith.mulf %47, %46 : vector<8x64xf32>
    %49 = math.tanh %48 : vector<8x64xf32>
    %cst_33 = arith.constant 1.000000e+00 : f32
    %50 = vector.broadcast %cst_33 : f32 to vector<8x64xf32>
    %51 = arith.addf %49, %50 : vector<8x64xf32>
    %cst_34 = arith.constant 5.000000e-01 : f32
    %52 = vector.broadcast %cst_34 : f32 to vector<8x64xf32>
    %53 = arith.mulf %52, %51 : vector<8x64xf32>
    %54 = arith.truncf %53 : vector<8x64xf32> to vector<8x64xbf16>
    %c0_35 = arith.constant 0 : index
    %c0_36 = arith.constant 0 : index
    %55 = vector.load %arg13[%c0_35, %c0_36] : memref<8x64xbf16, #tpu.memory_space<vmem>>, vector<8x64xbf16>
    tpu.vector_store %arg13[%c0_35, %c0_36], %54 {strides = array<i32>} : memref<8x64xbf16, #tpu.memory_space<vmem>>, vector<8x64xbf16>,
    %56 = vector.extract_strided_slice %22 {offsets = [0, 0], sizes = [8, 16], strides = [1, 1]} : vector<8x128xf32> to vector<8x16xf32>
    %c0_37 = arith.constant 0 : index
    %c0_38 = arith.constant 0 : index
    %57 = vector.load %arg14[%c0_37, %c0_38] : memref<8x16xf32, #tpu.memory_space<vmem>>, vector<8x16xf32>
    tpu.vector_store %arg14[%c0_37, %c0_38], %56 {strides = array<i32>} : memref<8x16xf32, #tpu.memory_space<vmem>>, vector<8x16xf32>,
    %58 = vector.extract_strided_slice %23 {offsets = [0, 0], sizes = [8, 16], strides = [1, 1]} : vector<8x128xf32> to vector<8x16xf32>
    %c0_39 = arith.constant 0 : index
    %c0_40 = arith.constant 0 : index
    %59 = vector.load %arg15[%c0_39, %c0_40] : memref<8x16xf32, #tpu.memory_space<vmem>>, vector<8x16xf32>
    tpu.vector_store %arg15[%c0_39, %c0_40], %58 {strides = array<i32>} : memref<8x16xf32, #tpu.memory_space<vmem>>, vector<8x16xf32>,
    return
  }
  func.func @transform_0(%arg0: i32) -> (i32, i32) {
    %c0_i32 = arith.constant 0 : i32
    %c0_i32_0 = arith.constant 0 : i32
    return %arg0, %c0_i32 : i32, i32
  }
  func.func @transform_1(%arg0: i32) -> (i32, i32) {
    %c0_i32 = arith.constant 0 : i32
    %c0_i32_0 = arith.constant 0 : i32
    %c0_i32_1 = arith.constant 0 : i32
    return %c0_i32, %c0_i32_0 : i32, i32
  }
  func.func @transform_2(%arg0: i32) -> (i32, i32) {
    %c0_i32 = arith.constant 0 : i32
    %c0_i32_0 = arith.constant 0 : i32
    %c0_i32_1 = arith.constant 0 : i32
    return %c0_i32, %c0_i32_0 : i32, i32
  }
  func.func @transform_3(%arg0: i32) -> (i32, i32) {
    %c0_i32 = arith.constant 0 : i32
    %c0_i32_0 = arith.constant 0 : i32
    %c0_i32_1 = arith.constant 0 : i32
    return %c0_i32, %c0_i32_0 : i32, i32
  }
  func.func @transform_4(%arg0: i32) -> (i32, i32) {
    %c0_i32 = arith.constant 0 : i32
    %c0_i32_0 = arith.constant 0 : i32
    %c0_i32_1 = arith.constant 0 : i32
    return %c0_i32, %c0_i32_0 : i32, i32
  }
  func.func @transform_5(%arg0: i32) -> (i32, i32) {
    %c0_i32 = arith.constant 0 : i32
    %c0_i32_0 = arith.constant 0 : i32
    %c0_i32_1 = arith.constant 0 : i32
    return %c0_i32, %c0_i32_0 : i32, i32
  }
  func.func @transform_6(%arg0: i32) -> (i32, i32) {
    %c0_i32 = arith.constant 0 : i32
    %c0_i32_0 = arith.constant 0 : i32
    %c0_i32_1 = arith.constant 0 : i32
    return %c0_i32, %c0_i32_0 : i32, i32
  }
  func.func @transform_7(%arg0: i32) -> (i32, i32) {
    %c0_i32 = arith.constant 0 : i32
    %c0_i32_0 = arith.constant 0 : i32
    %c0_i32_1 = arith.constant 0 : i32
    return %c0_i32, %c0_i32_0 : i32, i32
  }
  func.func @transform_8(%arg0: i32) -> (i32, i32) {
    %c0_i32 = arith.constant 0 : i32
    %c0_i32_0 = arith.constant 0 : i32
    %c0_i32_1 = arith.constant 0 : i32
    return %c0_i32, %c0_i32_0 : i32, i32
  }
  func.func @transform_9(%arg0: i32) -> (i32, i32) {
    %c0_i32 = arith.constant 0 : i32
    %c0_i32_0 = arith.constant 0 : i32
    %c0_i32_1 = arith.constant 0 : i32
    return %c0_i32, %c0_i32_0 : i32, i32
  }
  func.func @transform_10(%arg0: i32) -> (i32, i32) {
    %c0_i32 = arith.constant 0 : i32
    %c0_i32_0 = arith.constant 0 : i32
    %c0_i32_1 = arith.constant 0 : i32
    return %c0_i32, %c0_i32_0 : i32, i32
  }
  func.func @transform_11(%arg0: i32) -> (i32, i32) {
    %c0_i32 = arith.constant 0 : i32
    %c0_i32_0 = arith.constant 0 : i32
    return %arg0, %c0_i32 : i32, i32
  }
  func.func @transform_12(%arg0: i32) -> (i32, i32) {
    %c0_i32 = arith.constant 0 : i32
    %c0_i32_0 = arith.constant 0 : i32
    return %arg0, %c0_i32 : i32, i32
  }
  func.func @transform_13(%arg0: i32) -> (i32, i32) {
    %c0_i32 = arith.constant 0 : i32
    %c0_i32_0 = arith.constant 0 : i32
    return %arg0, %c0_i32 : i32, i32
  }
  func.func @transform_14(%arg0: i32) -> (i32, i32) {
    %c0_i32 = arith.constant 0 : i32
    %c0_i32_0 = arith.constant 0 : i32
    return %arg0, %c0_i32 : i32, i32
  }
}

</mosaic_0001>

<llo_original>
// kernel: _lambda_.1
$region0: #{_lambda_.1}
  #allocation0 [shape = 'u32[]', space=smem, size = 0x4, offset = 0x4, fixed_abs, tag = 'smem constant byte address 0x4 - core index']
  #allocation1 [shape = 'u32[144,128]{1,0:T(1,128)}', space=vmem, size = 0x12000, scoped, tag = 'internal scratch']
  %s0 = inlined_call_operand.vmem [shape: bf16[8,64], index: 0, kind: input, shape index: {}]
  %s1 = inlined_call_operand.vmem [shape: bf16[64,128], index: 1, kind: input, shape index: {}]
  %s2 = inlined_call_operand.vmem [shape: f32[1,128], index: 2, kind: input, shape index: {}]
  %s3 = inlined_call_operand.hbm [shape: bf16[128,128], index: 3, kind: input, shape index: {}]
  %s4 = inlined_call_operand.vmem [shape: f32[1,128], index: 4, kind: input, shape index: {}]
  %s5 = inlined_call_operand.hbm [shape: bf16[128,256], index: 5, kind: input, shape index: {}]
  %s6 = inlined_call_operand.vmem [shape: f32[1,256], index: 6, kind: input, shape index: {}]
  %s7 = inlined_call_operand.hbm [shape: bf16[128,128], index: 7, kind: input, shape index: {}]
  %s8 = inlined_call_operand.vmem [shape: f32[1,128], index: 8, kind: input, shape index: {}]
  %s9 = inlined_call_operand.hbm [shape: bf16[128,64], index: 9, kind: input, shape index: {}]
  %s10 = inlined_call_operand.vmem [shape: f32[1,64], index: 10, kind: input, shape index: {}]
  %s11 = inlined_call_operand.vmem [shape: bf16[8,128], index: 11, kind: input, shape index: {}]
  %s12 = inlined_call_operand.hbm [shape: bf16[8,64], index: 12, kind: output, shape index: {0}]
  %s13 = inlined_call_operand.hbm [shape: f32[8,16], index: 13, kind: output, shape index: {1}]
  %s14 = inlined_call_operand.hbm [shape: f32[8,16], index: 14, kind: output, shape index: {2}]
  %15 = xla_tuple %s12, %s13, %s14
  %s16 = sld [smem:[#allocation0]]
  $region90: #{_lambda_.1} parent=0
    _
  %s18 = ssub.s32 1, %s16
  %s19 = scalar_select 0, %s18, %s16
  $region1: #{_lambda_.1} parent=0
    #allocation2 [shape = 'u8[32768]{0}', space=vmem, size = 0x8000, scoped, tag = 'input window, operand 3, single buffered']
    #allocation3 [shape = 's32[1]{0}', space=sflag, size = 0x4, scoped, tag = 'scoped memory for _lambda_.1']
    #allocation4 [shape = 's32[1]{0}', space=sflag, size = 0x4, scoped, tag = 'scoped memory for _lambda_.1']
    #allocation5 [shape = 'u8[65536]{0}', space=vmem, size = 0x10000, scoped, tag = 'input window, operand 5, single buffered']
    #allocation6 [shape = 's32[1]{0}', space=sflag, size = 0x4, scoped, tag = 'scoped memory for _lambda_.1']
    #allocation7 [shape = 'u8[32768]{0}', space=vmem, size = 0x8000, scoped, tag = 'input window, operand 7, single buffered']
    #allocation8 [shape = 'u8[32768]{0}', space=vmem, size = 0x8000, scoped, tag = 'input window, operand 9, single buffered']
    #allocation9 [shape = 's32[1]{0}', space=sflag, size = 0x4, scoped, tag = 'scoped memory for _lambda_.1']
    #allocation10 [shape = 'u8[2048]{0}', space=vmem, size = 0x800, scoped, tag = 'output window, operand 0, single buffered']
    #allocation11 [shape = 'u8[4096]{0}', space=vmem, size = 0x1000, scoped, tag = 'output window, operand 1, single buffered']
    #allocation12 [shape = 's32[1]{0}', space=sflag, size = 0x4, scoped, tag = 'scoped memory for _lambda_.1']
    #allocation13 [shape = 'u8[4096]{0}', space=vmem, size = 0x1000, scoped, tag = 'output window, operand 2, single buffered']
    %20 = vsyncpa [#allocation3], 0
    %21 = vsyncpa [#allocation6], 0
    %22 = vsyncpa [#allocation9], 0
    %23 = vsyncpa [#allocation4], 0
    %24 = vsyncpa [#allocation12], 0
    // Predicated region
    $region2: #{_lambda_.1} parent=1 // pred_check
      _
    $region3: #{_lambda_.1} parent=1 // pred_check_branch
      %26 = sbr.rel (0) target = $region5
    $region4: #{_lambda_.1} parent=1 // pred_region
      _
    $region5: #{_lambda_.1} parent=1 // pred_fallthru
      _
    // Predicated region
    $region6: #{_lambda_.1} parent=1 // pred_check
      _
    $region7: #{_lambda_.1} parent=1 // pred_check_branch
      %28 = sbr.rel (0) target = $region9
    $region8: #{_lambda_.1} parent=1 // pred_region
      _
    $region9: #{_lambda_.1} parent=1 // pred_fallthru
      _
    // Predicated region
    $region10: #{_lambda_.1} parent=1 // pred_check
      _
    $region11: #{_lambda_.1} parent=1 // pred_check_branch
      %30 = sbr.rel (0) target = $region13
    $region12: #{_lambda_.1} parent=1 // pred_region
      _
    $region13: #{_lambda_.1} parent=1 // pred_fallthru
      _
    // Predicated region
    $region14: #{_lambda_.1} parent=1 // pred_check
      _
    $region15: #{_lambda_.1} parent=1 // pred_check_branch
      %32 = sbr.rel (0) target = $region17
    $region16: #{_lambda_.1} parent=1 // pred_region
      %s34 = ssub.s32 1024, 1024
      %35 = vsyncadd [#allocation3], %s34
      %s36 = sshll.u32 [#allocation2], 4
      %s37 = int_to_ptr.vmem [resolvable:$true] %s36
      %42 = dma.hbm_to_vmem [thread:$0]  %s3, 1024, %s37, [#allocation3], 64, 64, 4
    $region17: #{_lambda_.1} parent=1 // pred_fallthru
      _
    // Predicated region
    $region18: #{_lambda_.1} parent=1 // pred_check
      _
    $region19: #{_lambda_.1} parent=1 // pred_check_branch
      %44 = sbr.rel (0) target = $region21
    $region20: #{_lambda_.1} parent=1 // pred_region
      _
    $region21: #{_lambda_.1} parent=1 // pred_fallthru
      _
    // Predicated region
    $region22: #{_lambda_.1} parent=1 // pred_check
      _
    $region23: #{_lambda_.1} parent=1 // pred_check_branch
      %46 = sbr.rel (0) target = $region25
    $region24: #{_lambda_.1} parent=1 // pred_region
      %s48 = ssub.s32 2048, 2048
      %49 = vsyncadd [#allocation6], %s48
      %s50 = sshll.u32 [#allocation5], 4
      %s51 = int_to_ptr.vmem [resolvable:$true] %s50
      %56 = dma.hbm_to_vmem [thread:$0]  %s5, 2048, %s51, [#allocation6], 128, 128, 8
    $region25: #{_lambda_.1} parent=1 // pred_fallthru
      _
    // Predicated region
    $region26: #{_lambda_.1} parent=1 // pred_check
      _
    $region27: #{_lambda_.1} parent=1 // pred_check_branch
      %58 = sbr.rel (0) target = $region29
    $region28: #{_lambda_.1} parent=1 // pred_region
      _
    $region29: #{_lambda_.1} parent=1 // pred_fallthru
      _
    // Predicated region
    $region30: #{_lambda_.1} parent=1 // pred_check
      _
    $region31: #{_lambda_.1} parent=1 // pred_check_branch
      %60 = sbr.rel (0) target = $region33
    $region32: #{_lambda_.1} parent=1 // pred_region
      %s62 = ssub.s32 1024, 1024
      %63 = vsyncadd [#allocation6], %s62
      %s64 = sshll.u32 [#allocation7], 4
      %s65 = int_to_ptr.vmem [resolvable:$true] %s64
      %70 = dma.hbm_to_vmem [thread:$0]  %s7, 1024, %s65, [#allocation6], 64, 64, 4
    $region33: #{_lambda_.1} parent=1 // pred_fallthru
      _
    // Predicated region
    $region34: #{_lambda_.1} parent=1 // pred_check
      _
    $region35: #{_lambda_.1} parent=1 // pred_check_branch
      %72 = sbr.rel (0) target = $region37
    $region36: #{_lambda_.1} parent=1 // pred_region
      _
    $region37: #{_lambda_.1} parent=1 // pred_fallthru
      _
    // Predicated region
    $region38: #{_lambda_.1} parent=1 // pred_check
      _
    $region39: #{_lambda_.1} parent=1 // pred_check_branch
      %74 = sbr.rel (0) target = $region41
    $region40: #{_lambda_.1} parent=1 // pred_region
      %s76 = ssub.s32 1024, 1024
      %77 = vsyncadd [#allocation9], %s76
      %s78 = sshll.u32 [#allocation8], 4
      %s79 = int_to_ptr.vmem [resolvable:$true] %s78
      %84 = dma.hbm_to_vmem [thread:$0]  %s9, 1024, %s79, [#allocation9], 64, 64, 4
    $region41: #{_lambda_.1} parent=1 // pred_fallthru
      _
    // Predicated region
    $region42: #{_lambda_.1} parent=1 // pred_check
      _
    $region43: #{_lambda_.1} parent=1 // pred_check_branch
      %86 = sbr.rel (0) target = $region45
    $region44: #{_lambda_.1} parent=1 // pred_region
      _
    $region45: #{_lambda_.1} parent=1 // pred_fallthru
      _
    // Predicated region
    $region46: #{_lambda_.1} parent=1 // pred_check
      _
    $region47: #{_lambda_.1} parent=1 // pred_check_branch
      %88 = sbr.rel (0) target = $region49
    $region48: #{_lambda_.1} parent=1 // pred_region
      _
    $region49: #{_lambda_.1} parent=1 // pred_fallthru
      _
    // Predicated region
    $region50: #{_lambda_.1} parent=1 // pred_check
      _
    $region51: #{_lambda_.1} parent=1 // pred_check_branch
      %90 = sbr.rel (0) target = $region53
    $region52: #{_lambda_.1} parent=1 // pred_region
      %91 = dma.done [#allocation3], 1024
    $region53: #{_lambda_.1} parent=1 // pred_fallthru
      _
    // Predicated region
    $region54: #{_lambda_.1} parent=1 // pred_check
      _
    $region55: #{_lambda_.1} parent=1 // pred_check_branch
      %93 = sbr.rel (0) target = $region57
    $region56: #{_lambda_.1} parent=1 // pred_region
      %94 = dma.done [#allocation6], 2048
    $region57: #{_lambda_.1} parent=1 // pred_fallthru
      _
    // Predicated region
    $region58: #{_lambda_.1} parent=1 // pred_check
      _
    $region59: #{_lambda_.1} parent=1 // pred_check_branch
      %96 = sbr.rel (0) target = $region61
    $region60: #{_lambda_.1} parent=1 // pred_region
      %97 = dma.done [#allocation6], 1024
    $region61: #{_lambda_.1} parent=1 // pred_fallthru
      _
    // Predicated region
    $region62: #{_lambda_.1} parent=1 // pred_check
      _
    $region63: #{_lambda_.1} parent=1 // pred_check_branch
      %99 = sbr.rel (0) target = $region65
    $region64: #{_lambda_.1} parent=1 // pred_region
      %100 = dma.done [#allocation9], 1024
    $region65: #{_lambda_.1} parent=1 // pred_fallthru
      _
    %v102 = vld [vmem:[%s0] sm:$0xf]
    %v103 = vld [vmem:[%s1] sm:$0xf]
    %v104 = vld [vmem:[%s1 + $0x4] sm:$0xf]
    %v105 = vld [vmem:[%s1 + $0x8] sm:$0xf]
    %v106 = vld [vmem:[%s1 + $0xc] sm:$0xf]
    %v107 = vld [vmem:[%s1 + $0x10] sm:$0xf]
    %v108 = vld [vmem:[%s1 + $0x14] sm:$0xf]
    %v109 = vld [vmem:[%s1 + $0x18] sm:$0xf]
    %v110 = vld [vmem:[%s1 + $0x1c] sm:$0xf]
    %v111 = vld [vmem:[%s2] sm:$0x1]
    %v113 = vlaneseq
    %v114 = vshrl.u32 %v113, 7
    %v115 = vsub.s32 0, %v114
    %v116 = vrot.slane %v111, %v115
    %v126 = vunpack.c.l.b16 %v103
    %v127 = vunpack.c.l.b16 %v104
    %v128 = vunpack.c.l.b16 %v105
    %v129 = vunpack.c.l.b16 %v106
    %v130 = vunpack.c.l.b16 %v107
    %v131 = vunpack.c.l.b16 %v108
    %v132 = vunpack.c.l.b16 %v109
    %v133 = vunpack.c.l.b16 %v110
    %v134 = vpack.c.b16 %v127, %v126
    %v135 = vpack.c.b16 %v129, %v128
    %v136 = vpack.c.b16 %v131, %v130
    %v137 = vpack.c.b16 %v133, %v132
    %vm142 = vcmask 523264
    %v144 = vsel %vm142, %v102, 0
    %146 = vmatprep.subr.bf16.mxu0 0
    %147 = vmatpush1.bf16.msra.mxu0 0
    %148 = vmatprep.subr.bf16.mxu0 0
    %149 = vmatpush1.bf16.msra.mxu0 0
    %150 = vmatprep.subr.bf16.mxu0 0
    %151 = vmatpush1.bf16.msra.mxu0 0
    %152 = vmatprep.subr.bf16.mxu0 0
    %153 = vmatpush1.bf16.msra.mxu0 0
    %154 = vmatprep.subr.bf16.mxu0 0
    %155 = vmatpush1.bf16.msra.mxu0 %v137
    %156 = vmatprep.subr.bf16.mxu0 0
    %157 = vmatpush1.bf16.msra.mxu0 %v136
    %158 = vmatprep.subr.bf16.mxu0 0
    %159 = vmatpush1.bf16.msra.mxu0 %v135
    %160 = vmatprep.subr.bf16.mxu0 0
    %161 = vmatpush1.bf16.msra.mxu0 %v134
    %162 = vmatprep.subr.bf16.mxu0 0
    %163 = vmatpush2.bf16.msra.mxu0 0
    %164 = vmatprep.subr.bf16.mxu0 0
    %165 = vmatpush2.bf16.msra.mxu0 0
    %166 = vmatprep.subr.bf16.mxu0 0
    %167 = vmatpush2.bf16.msra.mxu0 0
    %168 = vmatprep.subr.bf16.mxu0 0
    %169 = vmatpush2.bf16.msra.mxu0 0
    %170 = vmatprep.subr.bf16.mxu0 0
    %171 = vmatpush2.bf16.msra.mxu0 0
    %172 = vmatprep.subr.bf16.mxu0 0
    %173 = vmatpush2.bf16.msra.mxu0 0
    %174 = vmatprep.subr.bf16.mxu0 0
    %175 = vmatpush2.bf16.msra.mxu0 0
    %176 = vmatprep.subr.bf16.mxu0 0
    %177 = vmatpush2.bf16.msra.mxu0 0
    %178 = vmatprep.mubr.bf16.mxu0 0
    %179 = vmatmul.mubr.bf16.gmra.mxu0 %v144
    %v180 = vpop.f32.mrf.mxu0
    %v181 = vadd.f32 %v116, %v180
    %v182 = vpop.f32.mrf.mxu0
    %v183 = vpop.f32.mrf.mxu0
    %v184 = vpop.f32.mrf.mxu0
    %185 = vdwg.mxu0
    %v186 = vmax.f32 %v181, 0.0
    %v187 = vpack.c.bf16 %v186, %v186
    %v188 = vld [vmem:[#allocation2] sm:$0xf]
    %v189 = vld [vmem:[#allocation2 + $0x4] sm:$0xf]
    %v190 = vld [vmem:[#allocation2 + $0x8] sm:$0xf]
    %v191 = vld [vmem:[#allocation2 + $0xc] sm:$0xf]
    %v192 = vld [vmem:[#allocation2 + $0x10] sm:$0xf]
    %v193 = vld [vmem:[#allocation2 + $0x14] sm:$0xf]
    %v194 = vld [vmem:[#allocation2 + $0x18] sm:$0xf]
    %v195 = vld [vmem:[#allocation2 + $0x1c] sm:$0xf]
    %v196 = vld [vmem:[#allocation2 + $0x20] sm:$0xf]
    %v197 = vld [vmem:[#allocation2 + $0x24] sm:$0xf]
    %v198 = vld [vmem:[#allocation2 + $0x28] sm:$0xf]
    %v199 = vld [vmem:[#allocation2 + $0x2c] sm:$0xf]
    %v200 = vld [vmem:[#allocation2 + $0x30] sm:$0xf]
    %v201 = vld [vmem:[#allocation2 + $0x34] sm:$0xf]
    %v202 = vld [vmem:[#allocation2 + $0x38] sm:$0xf]
    %v203 = vld [vmem:[#allocation2 + $0x3c] sm:$0xf]
    %v204 = vld [vmem:[%s4] sm:$0x1]
    %v206 = vlaneseq
    %v207 = vshrl.u32 %v206, 7
    %v208 = vsub.s32 0, %v207
    %v209 = vrot.slane %v204, %v208
    %v227 = vunpack.c.l.b16 %v188
    %v228 = vunpack.c.l.b16 %v189
    %v229 = vunpack.c.l.b16 %v190
    %v230 = vunpack.c.l.b16 %v191
    %v231 = vunpack.c.l.b16 %v192
    %v232 = vunpack.c.l.b16 %v193
    %v233 = vunpack.c.l.b16 %v194
    %v234 = vunpack.c.l.b16 %v195
    %v235 = vunpack.c.l.b16 %v196
    %v236 = vunpack.c.l.b16 %v197
    %v237 = vunpack.c.l.b16 %v198
    %v238 = vunpack.c.l.b16 %v199
    %v239 = vunpack.c.l.b16 %v200
    %v240 = vunpack.c.l.b16 %v201
    %v241 = vunpack.c.l.b16 %v202
    %v242 = vunpack.c.l.b16 %v203
    %v243 = vpack.c.b16 %v228, %v227
    %v244 = vpack.c.b16 %v230, %v229
    %v245 = vpack.c.b16 %v232, %v231
    %v246 = vpack.c.b16 %v234, %v233
    %v247 = vpack.c.b16 %v236, %v235
    %v248 = vpack.c.b16 %v238, %v237
    %v249 = vpack.c.b16 %v240, %v239
    %v250 = vpack.c.b16 %v242, %v241
    %259 = vmatprep.subr.bf16.mxu0 0
    %260 = vmatpush1.bf16.msra.mxu0 %v250
    %261 = vmatprep.subr.bf16.mxu0 0
    %262 = vmatpush1.bf16.msra.mxu0 %v249
    %263 = vmatprep.subr.bf16.mxu0 0
    %264 = vmatpush1.bf16.msra.mxu0 %v248
    %265 = vmatprep.subr.bf16.mxu0 0
    %266 = vmatpush1.bf16.msra.mxu0 %v247
    %267 = vmatprep.subr.bf16.mxu0 0
    %268 = vmatpush1.bf16.msra.mxu0 %v246
    %269 = vmatprep.subr.bf16.mxu0 0
    %270 = vmatpush1.bf16.msra.mxu0 %v245
    %271 = vmatprep.subr.bf16.mxu0 0
    %272 = vmatpush1.bf16.msra.mxu0 %v244
    %273 = vmatprep.subr.bf16.mxu0 0
    %274 = vmatpush1.bf16.msra.mxu0 %v243
    %275 = vmatprep.subr.bf16.mxu0 0
    %276 = vmatpush2.bf16.msra.mxu0 0
    %277 = vmatprep.subr.bf16.mxu0 0
    %278 = vmatpush2.bf16.msra.mxu0 0
    %279 = vmatprep.subr.bf16.mxu0 0
    %280 = vmatpush2.bf16.msra.mxu0 0
    %281 = vmatprep.subr.bf16.mxu0 0
    %282 = vmatpush2.bf16.msra.mxu0 0
    %283 = vmatprep.subr.bf16.mxu0 0
    %284 = vmatpush2.bf16.msra.mxu0 0
    %285 = vmatprep.subr.bf16.mxu0 0
    %286 = vmatpush2.bf16.msra.mxu0 0
    %287 = vmatprep.subr.bf16.mxu0 0
    %288 = vmatpush2.bf16.msra.mxu0 0
    %289 = vmatprep.subr.bf16.mxu0 0
    %290 = vmatpush2.bf16.msra.mxu0 0
    %291 = vmatprep.mubr.bf16.mxu0 0
    %292 = vmatmul.mubr.bf16.gmra.mxu0 %v187
    %v293 = vpop.f32.mrf.mxu0
    %v294 = vadd.f32 %v209, %v293
    %v295 = vpop.f32.mrf.mxu0
    %v296 = vpop.f32.mrf.mxu0
    %v297 = vpop.f32.mrf.mxu0
    %298 = vdwg.mxu0
    %v299 = vmax.f32 %v294, 0.0
    %v300 = vpack.c.bf16 %v299, %v299
    %v301 = vld [vmem:[#allocation5] sm:$0xff]
    %v302 = vld [vmem:[#allocation5 + $0x8] sm:$0xff]
    %v303 = vld [vmem:[#allocation5 + $0x10] sm:$0xff]
    %v304 = vld [vmem:[#allocation5 + $0x18] sm:$0xff]
    %v305 = vld [vmem:[#allocation5 + $0x20] sm:$0xff]
    %v306 = vld [vmem:[#allocation5 + $0x28] sm:$0xff]
    %v307 = vld [vmem:[#allocation5 + $0x30] sm:$0xff]
    %v308 = vld [vmem:[#allocation5 + $0x38] sm:$0xff]
    %v309 = vld [vmem:[#allocation5 + $0x40] sm:$0xff]
    %v310 = vld [vmem:[#allocation5 + $0x48] sm:$0xff]
    %v311 = vld [vmem:[#allocation5 + $0x50] sm:$0xff]
    %v312 = vld [vmem:[#allocation5 + $0x58] sm:$0xff]
    %v313 = vld [vmem:[#allocation5 + $0x60] sm:$0xff]
    %v314 = vld [vmem:[#allocation5 + $0x68] sm:$0xff]
    %v315 = vld [vmem:[#allocation5 + $0x70] sm:$0xff]
    %v316 = vld [vmem:[#allocation5 + $0x78] sm:$0xff]
    %v317 = vld [vmem:[%s6] sm:$0x3]
    %v319 = vlaneseq
    %v320 = vshrl.u32 %v319, 7
    %v321 = vsub.s32 0, %v320
    %v322 = vrot.slane %v317, %v321
    %v323 = vlaneseq
    %v324 = vshrl.u32 %v323, 7
    %v325 = vsub.s32 1, %v324
    %v326 = vrot.slane %v317, %v325
    %v345 = vunpack.c.l.b16 %v301
    %v346 = vunpack.c.h.b16 %v301
    %v347 = vunpack.c.l.b16 %v302
    %v348 = vunpack.c.h.b16 %v302
    %v349 = vunpack.c.l.b16 %v303
    %v350 = vunpack.c.h.b16 %v303
    %v351 = vunpack.c.l.b16 %v304
    %v352 = vunpack.c.h.b16 %v304
    %v353 = vunpack.c.l.b16 %v305
    %v354 = vunpack.c.h.b16 %v305
    %v355 = vunpack.c.l.b16 %v306
    %v356 = vunpack.c.h.b16 %v306
    %v357 = vunpack.c.l.b16 %v307
    %v358 = vunpack.c.h.b16 %v307
    %v359 = vunpack.c.l.b16 %v308
    %v360 = vunpack.c.h.b16 %v308
    %v361 = vunpack.c.l.b16 %v309
    %v362 = vunpack.c.h.b16 %v309
    %v363 = vunpack.c.l.b16 %v310
    %v364 = vunpack.c.h.b16 %v310
    %v365 = vunpack.c.l.b16 %v311
    %v366 = vunpack.c.h.b16 %v311
    %v367 = vunpack.c.l.b16 %v312
    %v368 = vunpack.c.h.b16 %v312
    %v369 = vunpack.c.l.b16 %v313
    %v370 = vunpack.c.h.b16 %v313
    %v371 = vunpack.c.l.b16 %v314
    %v372 = vunpack.c.h.b16 %v314
    %v373 = vunpack.c.l.b16 %v315
    %v374 = vunpack.c.h.b16 %v315
    %v375 = vunpack.c.l.b16 %v316
    %v376 = vunpack.c.h.b16 %v316
    %v377 = vpack.c.b16 %v347, %v345
    %v378 = vpack.c.b16 %v348, %v346
    %v379 = vpack.c.b16 %v351, %v349
    %v380 = vpack.c.b16 %v352, %v350
    %v381 = vpack.c.b16 %v355, %v353
    %v382 = vpack.c.b16 %v356, %v354
    %v383 = vpack.c.b16 %v359, %v357
    %v384 = vpack.c.b16 %v360, %v358
    %v385 = vpack.c.b16 %v363, %v361
    %v386 = vpack.c.b16 %v364, %v362
    %v387 = vpack.c.b16 %v367, %v365
    %v388 = vpack.c.b16 %v368, %v366
    %v389 = vpack.c.b16 %v371, %v369
    %v390 = vpack.c.b16 %v372, %v370
    %v391 = vpack.c.b16 %v375, %v373
    %v392 = vpack.c.b16 %v376, %v374
    %409 = vmatprep.subr.bf16.mxu0 %v392
    %410 = vmatpush1.bf16.msra.mxu0 %v391
    %411 = vmatprep.subr.bf16.mxu0 %v390
    %412 = vmatpush1.bf16.msra.mxu0 %v389
    %413 = vmatprep.subr.bf16.mxu0 %v388
    %414 = vmatpush1.bf16.msra.mxu0 %v387
    %415 = vmatprep.subr.bf16.mxu0 %v386
    %416 = vmatpush1.bf16.msra.mxu0 %v385
    %417 = vmatprep.subr.bf16.mxu0 %v384
    %418 = vmatpush1.bf16.msra.mxu0 %v383
    %419 = vmatprep.subr.bf16.mxu0 %v382
    %420 = vmatpush1.bf16.msra.mxu0 %v381
    %421 = vmatprep.subr.bf16.mxu0 %v380
    %422 = vmatpush1.bf16.msra.mxu0 %v379
    %423 = vmatprep.subr.bf16.mxu0 %v378
    %424 = vmatpush1.bf16.msra.mxu0 %v377
    %425 = vmatprep.subr.bf16.mxu0 0
    %426 = vmatpush2.bf16.msra.mxu0 0
    %427 = vmatprep.subr.bf16.mxu0 0
    %428 = vmatpush2.bf16.msra.mxu0 0
    %429 = vmatprep.subr.bf16.mxu0 0
    %430 = vmatpush2.bf16.msra.mxu0 0
    %431 = vmatprep.subr.bf16.mxu0 0
    %432 = vmatpush2.bf16.msra.mxu0 0
    %433 = vmatprep.subr.bf16.mxu0 0
    %434 = vmatpush2.bf16.msra.mxu0 0
    %435 = vmatprep.subr.bf16.mxu0 0
    %436 = vmatpush2.bf16.msra.mxu0 0
    %437 = vmatprep.subr.bf16.mxu0 0
    %438 = vmatpush2.bf16.msra.mxu0 0
    %439 = vmatprep.subr.bf16.mxu0 0
    %440 = vmatpush2.bf16.msra.mxu0 0
    %441 = vmatprep.mubr.bf16.mxu0 0
    %442 = vmatmul.mubr.bf16.gmra.mxu0 %v300
    %v443 = vpop.f32.mrf.mxu0
    %v444 = vadd.f32 %v322, %v443
    %v445 = vpop.f32.mrf.mxu0
    %v446 = vadd.f32 %v326, %v445
    %v447 = vpop.f32.mrf.mxu0
    %v448 = vpop.f32.mrf.mxu0
    %449 = vdwg.mxu0
    %v450 = vmul.f32 %v446, 0.5
    %v451 = vmul.f32 %v450, 1.442695
    %v452 = vpow.pop %v451
    %v453 = vld [vmem:[%s11] sm:$0xf]
    %v454 = vunpack.c.l.bf16 %v453
    %v455 = vmul.f32 %v454, %v452
    %v456 = vadd.f32 %v444, %v455
    %v457 = vpack.c.bf16 %v456, %v456
    %v458 = vld [vmem:[#allocation7] sm:$0xf]
    %v459 = vld [vmem:[#allocation7 + $0x4] sm:$0xf]
    %v460 = vld [vmem:[#allocation7 + $0x8] sm:$0xf]
    %v461 = vld [vmem:[#allocation7 + $0xc] sm:$0xf]
    %v462 = vld [vmem:[#allocation7 + $0x10] sm:$0xf]
    %v463 = vld [vmem:[#allocation7 + $0x14] sm:$0xf]
    %v464 = vld [vmem:[#allocation7 + $0x18] sm:$0xf]
    %v465 = vld [vmem:[#allocation7 + $0x1c] sm:$0xf]
    %v466 = vld [vmem:[#allocation7 + $0x20] sm:$0xf]
    %v467 = vld [vmem:[#allocation7 + $0x24] sm:$0xf]
    %v468 = vld [vmem:[#allocation7 + $0x28] sm:$0xf]
    %v469 = vld [vmem:[#allocation7 + $0x2c] sm:$0xf]
    %v470 = vld [vmem:[#allocation7 + $0x30] sm:$0xf]
    %v471 = vld [vmem:[#allocation7 + $0x34] sm:$0xf]
    %v472 = vld [vmem:[#allocation7 + $0x38] sm:$0xf]
    %v473 = vld [vmem:[#allocation7 + $0x3c] sm:$0xf]
    %v474 = vld [vmem:[%s8] sm:$0x1]
    %v476 = vlaneseq
    %v477 = vshrl.u32 %v476, 7
    %v478 = vsub.s32 0, %v477
    %v479 = vrot.slane %v474, %v478
    %v497 = vunpack.c.l.b16 %v458
    %v498 = vunpack.c.l.b16 %v459
    %v499 = vunpack.c.l.b16 %v460
    %v500 = vunpack.c.l.b16 %v461
    %v501 = vunpack.c.l.b16 %v462
    %v502 = vunpack.c.l.b16 %v463
    %v503 = vunpack.c.l.b16 %v464
    %v504 = vunpack.c.l.b16 %v465
    %v505 = vunpack.c.l.b16 %v466
    %v506 = vunpack.c.l.b16 %v467
    %v507 = vunpack.c.l.b16 %v468
    %v508 = vunpack.c.l.b16 %v469
    %v509 = vunpack.c.l.b16 %v470
    %v510 = vunpack.c.l.b16 %v471
    %v511 = vunpack.c.l.b16 %v472
    %v512 = vunpack.c.l.b16 %v473
    %v513 = vpack.c.b16 %v498, %v497
    %v514 = vpack.c.b16 %v500, %v499
    %v515 = vpack.c.b16 %v502, %v501
    %v516 = vpack.c.b16 %v504, %v503
    %v517 = vpack.c.b16 %v506, %v505
    %v518 = vpack.c.b16 %v508, %v507
    %v519 = vpack.c.b16 %v510, %v509
    %v520 = vpack.c.b16 %v512, %v511
    %529 = vmatprep.subr.bf16.mxu0 0
    %530 = vmatpush1.bf16.msra.mxu0 %v520
    %531 = vmatprep.subr.bf16.mxu0 0
    %532 = vmatpush1.bf16.msra.mxu0 %v519
    %533 = vmatprep.subr.bf16.mxu0 0
    %534 = vmatpush1.bf16.msra.mxu0 %v518
    %535 = vmatprep.subr.bf16.mxu0 0
    %536 = vmatpush1.bf16.msra.mxu0 %v517
    %537 = vmatprep.subr.bf16.mxu0 0
    %538 = vmatpush1.bf16.msra.mxu0 %v516
    %539 = vmatprep.subr.bf16.mxu0 0
    %540 = vmatpush1.bf16.msra.mxu0 %v515
    %541 = vmatprep.subr.bf16.mxu0 0
    %542 = vmatpush1.bf16.msra.mxu0 %v514
    %543 = vmatprep.subr.bf16.mxu0 0
    %544 = vmatpush1.bf16.msra.mxu0 %v513
    %545 = vmatprep.subr.bf16.mxu0 0
    %546 = vmatpush2.bf16.msra.mxu0 0
    %547 = vmatprep.subr.bf16.mxu0 0
    %548 = vmatpush2.bf16.msra.mxu0 0
    %549 = vmatprep.subr.bf16.mxu0 0
    %550 = vmatpush2.bf16.msra.mxu0 0
    %551 = vmatprep.subr.bf16.mxu0 0
    %552 = vmatpush2.bf16.msra.mxu0 0
    %553 = vmatprep.subr.bf16.mxu0 0
    %554 = vmatpush2.bf16.msra.mxu0 0
    %555 = vmatprep.subr.bf16.mxu0 0
    %556 = vmatpush2.bf16.msra.mxu0 0
    %557 = vmatprep.subr.bf16.mxu0 0
    %558 = vmatpush2.bf16.msra.mxu0 0
    %559 = vmatprep.subr.bf16.mxu0 0
    %560 = vmatpush2.bf16.msra.mxu0 0
    %561 = vmatprep.mubr.bf16.mxu0 0
    %562 = vmatmul.mubr.bf16.gmra.mxu0 %v457
    %v563 = vpop.f32.mrf.mxu0
    %v564 = vadd.f32 %v479, %v563
    %v565 = vpop.f32.mrf.mxu0
    %v566 = vpop.f32.mrf.mxu0
    %v567 = vpop.f32.mrf.mxu0
    %568 = vdwg.mxu0
    %v569 = vmax.f32 %v564, 0.0
    %v570 = vpack.c.bf16 %v569, %v569
    %v571 = vld [vmem:[#allocation8] sm:$0xf]
    %v572 = vld [vmem:[#allocation8 + $0x4] sm:$0xf]
    %v573 = vld [vmem:[#allocation8 + $0x8] sm:$0xf]
    %v574 = vld [vmem:[#allocation8 + $0xc] sm:$0xf]
    %v575 = vld [vmem:[#allocation8 + $0x10] sm:$0xf]
    %v576 = vld [vmem:[#allocation8 + $0x14] sm:$0xf]
    %v577 = vld [vmem:[#allocation8 + $0x18] sm:$0xf]
    %v578 = vld [vmem:[#allocation8 + $0x1c] sm:$0xf]
    %v579 = vld [vmem:[#allocation8 + $0x20] sm:$0xf]
    %v580 = vld [vmem:[#allocation8 + $0x24] sm:$0xf]
    %v581 = vld [vmem:[#allocation8 + $0x28] sm:$0xf]
    %v582 = vld [vmem:[#allocation8 + $0x2c] sm:$0xf]
    %v583 = vld [vmem:[#allocation8 + $0x30] sm:$0xf]
    %v584 = vld [vmem:[#allocation8 + $0x34] sm:$0xf]
    %v585 = vld [vmem:[#allocation8 + $0x38] sm:$0xf]
    %v586 = vld [vmem:[#allocation8 + $0x3c] sm:$0xf]
    %v587 = vld [vmem:[%s10] sm:$0x1]
    %v589 = vlaneseq
    %v590 = vshrl.u32 %v589, 7
    %v591 = vsub.s32 0, %v590
    %v592 = vrot.slane %v587, %v591
    %v610 = vunpack.c.l.b16 %v571
    %v611 = vunpack.c.l.b16 %v572
    %v612 = vunpack.c.l.b16 %v573
    %v613 = vunpack.c.l.b16 %v574
    %v614 = vunpack.c.l.b16 %v575
    %v615 = vunpack.c.l.b16 %v576
    %v616 = vunpack.c.l.b16 %v577
    %v617 = vunpack.c.l.b16 %v578
    %v618 = vunpack.c.l.b16 %v579
    %v619 = vunpack.c.l.b16 %v580
    %v620 = vunpack.c.l.b16 %v581
    %v621 = vunpack.c.l.b16 %v582
    %v622 = vunpack.c.l.b16 %v583
    %v623 = vunpack.c.l.b16 %v584
    %v624 = vunpack.c.l.b16 %v585
    %v625 = vunpack.c.l.b16 %v586
    %v626 = vpack.c.b16 %v611, %v610
    %v627 = vpack.c.b16 %v613, %v612
    %v628 = vpack.c.b16 %v615, %v614
    %v629 = vpack.c.b16 %v617, %v616
    %v630 = vpack.c.b16 %v619, %v618
    %v631 = vpack.c.b16 %v621, %v620
    %v632 = vpack.c.b16 %v623, %v622
    %v633 = vpack.c.b16 %v625, %v624
    %642 = vmatprep.subr.bf16.mxu0 0
    %643 = vmatpush1.bf16.msra.mxu0 %v633
    %644 = vmatprep.subr.bf16.mxu0 0
    %645 = vmatpush1.bf16.msra.mxu0 %v632
    %646 = vmatprep.subr.bf16.mxu0 0
    %647 = vmatpush1.bf16.msra.mxu0 %v631
    %648 = vmatprep.subr.bf16.mxu0 0
    %649 = vmatpush1.bf16.msra.mxu0 %v630
    %650 = vmatprep.subr.bf16.mxu0 0
    %651 = vmatpush1.bf16.msra.mxu0 %v629
    %652 = vmatprep.subr.bf16.mxu0 0
    %653 = vmatpush1.bf16.msra.mxu0 %v628
    %654 = vmatprep.subr.bf16.mxu0 0
    %655 = vmatpush1.bf16.msra.mxu0 %v627
    %656 = vmatprep.subr.bf16.mxu0 0
    %657 = vmatpush1.bf16.msra.mxu0 %v626
    %658 = vmatprep.subr.bf16.mxu0 0
    %659 = vmatpush2.bf16.msra.mxu0 0
    %660 = vmatprep.subr.bf16.mxu0 0
    %661 = vmatpush2.bf16.msra.mxu0 0
    %662 = vmatprep.subr.bf16.mxu0 0
    %663 = vmatpush2.bf16.msra.mxu0 0
    %664 = vmatprep.subr.bf16.mxu0 0
    %665 = vmatpush2.bf16.msra.mxu0 0
    %666 = vmatprep.subr.bf16.mxu0 0
    %667 = vmatpush2.bf16.msra.mxu0 0
    %668 = vmatprep.subr.bf16.mxu0 0
    %669 = vmatpush2.bf16.msra.mxu0 0
    %670 = vmatprep.subr.bf16.mxu0 0
    %671 = vmatpush2.bf16.msra.mxu0 0
    %672 = vmatprep.subr.bf16.mxu0 0
    %673 = vmatpush2.bf16.msra.mxu0 0
    %674 = vmatprep.mubr.bf16.mxu0 0
    %675 = vmatmul.mubr.bf16.gmra.mxu0 %v570
    %v676 = vpop.f32.mrf.mxu0
    %v677 = vadd.f32 %v592, %v676
    %v678 = vpop.f32.mrf.mxu0
    %v679 = vpop.f32.mrf.mxu0
    %v680 = vpop.f32.mrf.mxu0
    %681 = vdwg.mxu0
    %v682 = vmax.f32 %v677, 0.0
    %v683 = vmul.f32 %v682, 0.5
    %v684 = vtanh.pop %v683
    %v685 = vadd.f32 %v684, 1.0
    %v686 = vmul.f32 %v685, 0.5
    %v687 = vpack.c.bf16 %v686, %v686
    %vm688 = vcmask 519168
    %689 = vst.msk [vmem:[#allocation10] sm:$0xf] %vm688, %v687
    %vm690 = vcmask 130048
    %691 = vst.msk [vmem:[#allocation11] sm:$0xff] %vm690, %v444
    %692 = vst.msk [vmem:[#allocation13] sm:$0xff] %vm690, %v446
    // Predicated region
    $region66: #{_lambda_.1} parent=1 // pred_check
      _
    $region67: #{_lambda_.1} parent=1 // pred_check_branch
      %694 = sbr.rel (0) target = $region69
    $region68: #{_lambda_.1} parent=1 // pred_region
      %s696 = ssub.s32 64, 64
      %697 = vsyncadd [#allocation4], %s696
      %s699 = sshll.u32 [#allocation10], 4
      %s700 = int_to_ptr.vmem [resolvable:$true] %s699
      %702 = dma.vmem_to_hbm [thread:$0]  %s700, 64, %s12, [#allocation4]
    $region69: #{_lambda_.1} parent=1 // pred_fallthru
      _
    // Predicated region
    $region70: #{_lambda_.1} parent=1 // pred_check
      _
    $region71: #{_lambda_.1} parent=1 // pred_check_branch
      %704 = sbr.rel (0) target = $region73
    $region72: #{_lambda_.1} parent=1 // pred_region
      %s706 = ssub.s32 128, 128
      %707 = vsyncadd [#allocation12], %s706
      %s709 = sshll.u32 [#allocation11], 4
      %s710 = int_to_ptr.vmem [resolvable:$true] %s709
      %712 = dma.vmem_to_hbm [thread:$0]  %s710, 128, %s13, [#allocation12]
    $region73: #{_lambda_.1} parent=1 // pred_fallthru
      _
    // Predicated region
    $region74: #{_lambda_.1} parent=1 // pred_check
      _
    $region75: #{_lambda_.1} parent=1 // pred_check_branch
      %714 = sbr.rel (0) target = $region77
    $region76: #{_lambda_.1} parent=1 // pred_region
      %s716 = ssub.s32 128, 128
      %717 = vsyncadd [#allocation12], %s716
      %s719 = sshll.u32 [#allocation13], 4
      %s720 = int_to_ptr.vmem [resolvable:$true] %s719
      %722 = dma.vmem_to_hbm [thread:$0]  %s720, 128, %s14, [#allocation12]
    $region77: #{_lambda_.1} parent=1 // pred_fallthru
      _
    // Predicated region
    $region78: #{_lambda_.1} parent=1 // pred_check
      _
    $region79: #{_lambda_.1} parent=1 // pred_check_branch
      %724 = sbr.rel (0) target = $region81
    $region80: #{_lambda_.1} parent=1 // pred_region
      %725 = dma.done [#allocation4], 64
    $region81: #{_lambda_.1} parent=1 // pred_fallthru
      _
    // Predicated region
    $region82: #{_lambda_.1} parent=1 // pred_check
      _
    $region83: #{_lambda_.1} parent=1 // pred_check_branch
      %727 = sbr.rel (0) target = $region85
    $region84: #{_lambda_.1} parent=1 // pred_region
      %728 = dma.done [#allocation12], 128
    $region85: #{_lambda_.1} parent=1 // pred_fallthru
      _
    // Predicated region
    $region86: #{_lambda_.1} parent=1 // pred_check
      _
    $region87: #{_lambda_.1} parent=1 // pred_check_branch
      %730 = sbr.rel (0) target = $region89
    $region88: #{_lambda_.1} parent=1 // pred_region
      %731 = dma.done [#allocation12], 128
    $region89: #{_lambda_.1} parent=1 // pred_fallthru
      _
    %732 = vsyncpa [#allocation3], 1
    %733 = vsyncpa [#allocation6], 1
    %734 = vsyncpa [#allocation9], 1
    %735 = vsyncpa [#allocation4], 1
    %736 = vsyncpa [#allocation12], 1

</llo_original>
